<compile_context>
chip_gen: v7x
topology: tpu7x:2x2x1
jax: 0.10.0
libtpu: 0.0.40
codegen_flags: <defaults>
</compile_context>

<pallas_src>
import functools
import math

import jax
import jax.numpy as jnp
import numpy as np
from jax import lax
from jax.experimental import pallas as pl
from jax.experimental.pallas import tpu as pltpu

NORM_EPS = 1e-12  # torch.nn.functional.normalize default eps


# ------------------------------ helpers --------------------------------------
def _round_up(x, m):
    return (x + m - 1) // m * m


def _vmem_budget():
    """Generation-aware VMEM working-set budget and vmem_limit_bytes."""
    cap = 64 * 1024 * 1024
    try:
        info = pltpu.get_tpu_info()
        cap = int(getattr(info, "vmem_capacity_bytes", cap)) or cap
    except Exception:
        pass
    # v7x (64 MiB physical): ~35 MiB tiles / 48 MiB limit.
    # v5e/v6e (128 MiB):     ~70 MiB tiles / 96 MiB limit.
    budget = min(int(cap * 0.55), 96 * 1024 * 1024)
    limit = min(int(cap * 0.75), 120 * 1024 * 1024)
    return budget, limit


def _est_vmem(tb, tc, dp, w_bytes):
    """Conservative per-call VMEM estimate for the main kernel."""
    x_t = 2 * tb * dp * 2            # bf16 x tile, double buffered
    w_t = 2 * tc * dp * w_bytes      # weight tile (f32 raw or bf16), double buffered
    o_t = 2 * tb * tc * 4            # f32 output tile, double buffered
    small = 4 * tb * 4 * 4           # label tile + per-row accumulators
    temps = 8 * tb * tc * 4 + tc * dp * 2   # elementwise epilogue temps + bf16 normalised weight
    return x_t + w_t + o_t + small + temps


def _plan(B, C, D, budget):
    """Pick padded shapes and tiles.  Goal: nb == 1 so the weight streams once."""
    d_pad = _round_up(D, 128)
    tb_cap = 512
    tb = _round_up(B, 8) if B <= tb_cap else tb_cap
    # Shrink TB only if even the smallest C tile cannot fit (very large D).
    while tb > 8 and _est_vmem(tb, 128, d_pad, 4) > budget:
        tb = max(8, _round_up(tb // 2, 8))
    b_pad = _round_up(B, tb)
    nb = b_pad // tb
    fuse_w = nb == 1                       # weight streamed once -> fuse its normalisation
    w_bytes = 4 if fuse_w else 2
    tc = 128
    for cand in (1024, 512, 256, 128):
        if _est_vmem(tb, cand, d_pad, w_bytes) <= budget:
            tc = cand
            break
    tc = min(tc, _round_up(C, 128))
    c_pad = _round_up(C, tc)
    nc = c_pad // tc
    return tb, tc, b_pad, c_pad, d_pad, fuse_w, nb, nc


def _acos_poly(x):
    """arccos via Abramowitz & Stegun 4.4.45 (max error ~7e-5 rad).

    Used in-kernel so no Mosaic acos/atan2 lowering is required; negligible
    after the k=80 sigmoid."""
    ax = jnp.abs(x)
    p = 1.5707288 + ax * (-0.2121144 + ax * (0.0742610 + ax * (-0.0187293)))
    r = jnp.sqrt(jnp.maximum(1.0 - ax, 0.0)) * p
    return jnp.where(x < 0.0, math.pi - r, r)


# ---------------------- prep kernel: row L2 normalisation ---------------------
def _normalize_rows_kernel(src_ref, dst_ref):
    x = src_ref[...]
    ssq = jnp.sum(x * x, axis=-1, keepdims=True)
    # F.normalize: x / max(||x||, eps)  ==  x * rsqrt(max(||x||^2, eps^2))
    dst_ref[...] = (x * lax.rsqrt(jnp.maximum(ssq, NORM_EPS * NORM_EPS))).astype(dst_ref.dtype)


def _normalize_rows(mat, out_dtype, row_tile, vmem_limit):
    rows, d = mat.shape
    assert rows % row_tile == 0
    return pl.pallas_call(
        _normalize_rows_kernel,
        out_shape=jax.ShapeDtypeStruct((rows, d), out_dtype),
        grid=(rows // row_tile,),
        in_specs=[pl.BlockSpec((row_tile, d), lambda i: (i, 0))],
        out_specs=pl.BlockSpec((row_tile, d), lambda i: (i, 0)),
        compiler_params=pltpu.CompilerParams(
            dimension_semantics=("parallel",),
            vmem_limit_bytes=int(vmem_limit)),
    )(mat)


# ------------------- main kernel: scaled cosine + fused inter loss ------------
def _sface_main_kernel(xn_ref, w_ref, lab_ref, out_ref, inter_ref, wjsum_ref,
                       *, s, k, b, normalize_w):
    j = pl.program_id(1)

    @pl.when(j == 0)
    def _init():
        inter_ref[...] = jnp.zeros_like(inter_ref)
        wjsum_ref[...] = jnp.zeros_like(wjsum_ref)

    w = w_ref[...]
    if normalize_w:
        # Fused weight row-normalisation: raw f32 weight tile streamed exactly
        # once from HBM; rsqrt/reduce ride on EUP/XLU slack under MXU + DMA.
        ssq = jnp.sum(w * w, axis=-1, keepdims=True)
        w = (w * lax.rsqrt(jnp.maximum(ssq, NORM_EPS * NORM_EPS))).astype(jnp.bfloat16)

    # Transposed-RHS matmul (contract dim 1 of both operands) -> no XLU
    # relayout before the MXU push.  bf16 operands, f32 accumulation.
    cos = lax.dot_general(
        xn_ref[...], w,
        dimension_numbers=(((1,), (1,)), ((), ())),
        preferred_element_type=jnp.float32)
    out = cos * s
    out_ref[...] = out

    # ---- fused SFace inter-loss epilogue (saves a full B x C HBM round-trip) -
    tb, tc = out.shape
    col = lax.broadcasted_iota(jnp.int32, (tb, tc), 1) + j * tc
    zero_hot = (col != lab_ref[...]).astype(jnp.float32)     # lab_ref: (TB,1) i32
    wj = zero_hot * out
    theta = _acos_poly(jnp.clip(wj * (1.0 / s), -1.0, 1.0))
    # weight_j = 1 / (1 + exp(k*(theta - b))); clamp the exponent -> exp finite.
    wgt = 1.0 / (1.0 + jnp.exp(jnp.minimum(k * (theta - b), 60.0)))
    inter_ref[...] += jnp.sum(wgt * wj, axis=-1, keepdims=True)
    wjsum_ref[...] += jnp.sum(wj, axis=-1, keepdims=True)


def _sface_main(xn, w_in, lab2d, s, k, b, tb, tc, fuse_w, vmem_limit):
    b_pad, d_pad = xn.shape
    c_pad = w_in.shape[0]
    nb, nc = b_pad // tb, c_pad // tc
    kern = functools.partial(_sface_main_kernel, s=float(s), k=float(k),
                             b=float(b), normalize_w=fuse_w)
    return pl.pallas_call(
        kern,
        out_shape=(jax.ShapeDtypeStruct((b_pad, c_pad), jnp.float32),
                   jax.ShapeDtypeStruct((b_pad, 1), jnp.float32),
                   jax.ShapeDtypeStruct((b_pad, 1), jnp.float32)),
        grid=(nb, nc),
        in_specs=[pl.BlockSpec((tb, d_pad), lambda i, j: (i, 0)),
                  pl.BlockSpec((tc, d_pad), lambda i, j: (j, 0)),
                  pl.BlockSpec((tb, 1), lambda i, j: (i, 0))],
        out_specs=(pl.BlockSpec((tb, tc), lambda i, j: (i, j)),
                   pl.BlockSpec((tb, 1), lambda i, j: (i, 0)),
                   pl.BlockSpec((tb, 1), lambda i, j: (i, 0))),
        compiler_params=pltpu.CompilerParams(
            dimension_semantics=("parallel", "arbitrary"),
            vmem_limit_bytes=int(vmem_limit)),
    )(xn, w_in, lab2d)


# ------------------------------ full forward ---------------------------------
def sface_loss_forward(x, weight, label, s=64.0, k=80.0, a=0.9, b=1.2):
    """SFaceLoss.forward (device_id=None path).

    x: (B, D) f32, weight: (C, D) f32, label: (B,) int
    returns (output, loss, intra_mean, inter_mean, Wyi_s_mean, Wj_s_mean)
    """
    x = jnp.asarray(x, jnp.float32)
    weight = jnp.asarray(weight, jnp.float32)
    label = jnp.asarray(label, jnp.int32)
    B, D = x.shape
    C, D2 = weight.shape
    assert D == D2 and label.shape == (B,)

    budget, vmem_limit = _vmem_budget()
    tb, tc, b_pad, c_pad, d_pad, fuse_w, nb, nc = _plan(B, C, D, budget)

    # Zero padding to aligned shapes (does not change row norms / dot products;
    # padded weight rows normalise to 0 -> cosine 0 -> zero loss contribution).
    xp = x if (b_pad, d_pad) == (B, D) else jnp.pad(x, ((0, b_pad - B), (0, d_pad - D)))
    wp = weight if (c_pad, d_pad) == (C, D) else jnp.pad(weight, ((0, c_pad - C), (0, d_pad - D)))
    labp = label if b_pad == B else jnp.pad(label, (0, b_pad - B))
    lab2d = labp.reshape(b_pad, 1)

    # x: one-shot row normalisation -> bf16 stream into the matmul.
    xn = _normalize_rows(xp, jnp.bfloat16, tb, vmem_limit)

    if fuse_w:
        w_in = wp                                    # raw f32, normalised in-kernel, streamed once
    else:
        w_in = _normalize_rows(wp, jnp.bfloat16, tc, vmem_limit)

    out_p, inter_rows, wj_rowsum = _sface_main(xn, w_in, lab2d, s, k, b,
                                               tb, tc, fuse_w, vmem_limit)

    output = out_p if (b_pad, c_pad) == (B, C) else out_p[:B, :C]
    inter_loss = inter_rows[:B, 0]
    wj_sum = jnp.sum(wj_rowsum[:B, 0])

    # Intra term: WyiX recomputed in f32 in the wrapper (B dot products of
    # length D) so the k=80 sigmoid is not fed bf16-rounded cosines.
    w_rows = weight[label]                                               # (B, D)
    wn_rows = w_rows / jnp.maximum(
        jnp.sqrt(jnp.sum(w_rows * w_rows, axis=1, keepdims=True)), NORM_EPS)
    xn_f32 = x / jnp.maximum(
        jnp.sqrt(jnp.sum(x * x, axis=1, keepdims=True)), NORM_EPS)
    wyix = s * jnp.sum(xn_f32 * wn_rows, axis=1)                          # (B,)
    # clip only guards fp round-off past |1| (torch would produce NaN there)
    theta_yi = lax.stop_gradient(jnp.arccos(jnp.clip(wyix / s, -1.0, 1.0)))
    weight_yi = lax.stop_gradient(1.0 / (1.0 + jnp.exp(-k * (theta_yi - a))))
    intra_loss = -weight_yi * wyix

    intra_m = intra_loss.mean()
    inter_m = inter_loss.mean()
    loss = intra_m + inter_m
    wyi_s_m = wyix.mean() / s
    wj_s_m = wj_sum / (s * B * C)
    return output, loss, intra_m, inter_m, wyi_s_m, wj_s_m


# ------------------------------ reference (f32) -------------------------------
def _reference_output(x, w, s):
    xn = x / jnp.maximum(jnp.sqrt(jnp.sum(x * x, axis=1, keepdims=True)), NORM_EPS)
    wn = w / jnp.maximum(jnp.sqrt(jnp.sum(w * w, axis=1, keepdims=True)), NORM_EPS)
    return (xn @ wn.T) * s


if __name__ == "__main__":
    in_features = 32
    out_features = 128
    batch = 8
    s, k, a, b = 64.0, 80.0, 0.9, 1.2

    key = jax.random.PRNGKey(0)
    k_w, k_x, k_l = jax.random.split(key, 3)

    # xavier_normal_(weight, gain=2, mode='out'): N(0, gain * sqrt(2 / fan_out))
    std = 2.0 * math.sqrt(2.0 / out_features)
    weight = std * jax.random.normal(k_w, (out_features, in_features), jnp.float32)
    x = jax.random.normal(k_x, (batch, in_features), jnp.float32)
    label = jax.random.randint(k_l, (batch,), 0, out_features, jnp.int32)

    outs = jax.block_until_ready(sface_loss_forward(x, weight, label, s, k, a, b))
    output, loss, intra_m, inter_m, wyi_s_m, wj_s_m = outs

    assert output.shape == (batch, out_features)
    assert output.dtype == jnp.float32

    # bf16 MXU operands -> |delta| on the s=64-scaled logits stays well below 0.75.
    ref_out = _reference_output(x, weight, s)
    np.testing.assert_allclose(np.asarray(output), np.asarray(ref_out),
                               atol=0.75, rtol=0.0)

    # Fused epilogue consistency check: recompute the inter loss / Wj_s mean in
    # XLA from the kernel's own logits (differences = acos polynomial only).
    out_np = np.asarray(output)
    one_hot = np.arange(out_features)[None, :] == np.asarray(label)[:, None]
    wj_ref = np.where(one_hot, 0.0, out_np)
    theta_ref = np.arccos(np.clip(wj_ref / s, -1.0, 1.0))
    weight_ref = 1.0 / (1.0 + np.exp(np.minimum(k * (theta_ref - b), 60.0)))
    inter_ref_m = (weight_ref * wj_ref).sum(axis=1).mean()
    np.testing.assert_allclose(float(inter_m), float(inter_ref_m), rtol=0.1, atol=1.0)
    np.testing.assert_allclose(float(wj_s_m), float(wj_ref.mean() / s), rtol=1e-3, atol=1e-5)

    for v in (loss, intra_m, inter_m, wyi_s_m, wj_s_m):
        assert np.isfinite(np.asarray(v)).all()

    print("KERNEL_OK")
</pallas_src>

<mosaic_0001>
module attributes {stable_mosaic.version = 11 : i64} {
  func.func @_normalize_rows_kernel(%arg0: i32, %arg1: memref<8x128xf32, #tpu.memory_space<vmem>>, %arg2: memref<8x128xbf16, #tpu.memory_space<vmem>>) attributes {dimension_semantics = [#tpu.dimension_semantics<parallel>], iteration_bounds = array<i64: 1>, scalar_prefetch = 0 : i64, scratch_operands = 0 : i64, tpu.core_type = #tpu.core_type<tc>, window_params = [{transform_indices = @transform_0, window_bounds = array<i64: 8, 128>}, {transform_indices = @transform_1, window_bounds = array<i64: 8, 128>}]} {
    %c0 = arith.constant 0 : index
    %c0_0 = arith.constant 0 : index
    %0 = vector.load %arg1[%c0, %c0_0] : memref<8x128xf32, #tpu.memory_space<vmem>>, vector<8x128xf32>
    %1 = arith.mulf %0, %0 : vector<8x128xf32>
    %cst = arith.constant dense<0.000000e+00> : vector<8xf32>
    %2 = vector.multi_reduction <add>, %1, %cst [1] : vector<8x128xf32> to vector<8xf32>
    %3 = vector.shape_cast %2 : vector<8xf32> to vector<8x1xf32>
    %cst_1 = arith.constant 1.000000e-24 : f32
    %4 = vector.broadcast %cst_1 : f32 to vector<8x1xf32>
    %5 = arith.maximumf %3, %4 : vector<8x1xf32>
    %6 = math.rsqrt %5 : vector<8x1xf32>
    %7 = vector.broadcast %6 : vector<8x1xf32> to vector<8x128xf32>
    %8 = arith.mulf %0, %7 : vector<8x128xf32>
    %9 = arith.truncf %8 : vector<8x128xf32> to vector<8x128xbf16>
    %c0_2 = arith.constant 0 : index
    %c0_3 = arith.constant 0 : index
    %10 = vector.load %arg2[%c0_2, %c0_3] : memref<8x128xbf16, #tpu.memory_space<vmem>>, vector<8x128xbf16>
    tpu.vector_store %arg2[%c0_2, %c0_3], %9 {strides = array<i32>} : memref<8x128xbf16, #tpu.memory_space<vmem>>, vector<8x128xbf16>,
    return
  }
  func.func @transform_0(%arg0: i32) -> (i32, i32) {
    %c0_i32 = arith.constant 0 : i32
    %c0_i32_0 = arith.constant 0 : i32
    return %arg0, %c0_i32 : i32, i32
  }
  func.func @transform_1(%arg0: i32) -> (i32, i32) {
    %c0_i32 = arith.constant 0 : i32
    %c0_i32_0 = arith.constant 0 : i32
    return %arg0, %c0_i32 : i32, i32
  }
}

</mosaic_0001>

<llo_original>
// kernel: tpu_custom_call.1
$region0: #{tpu_custom_call.1}
  #allocation0 [shape = 'u32[]', space=smem, size = 0x4, offset = 0x4, fixed_abs, tag = 'smem constant byte address 0x4 - core index']
  #allocation1 [shape = 'u32[144,128]{1,0:T(1,128)}', space=vmem, size = 0x12000, scoped, tag = 'internal scratch']
  %s0 = inlined_call_operand.hbm [shape: f32[8,128], index: 0, kind: input, shape index: {}]
  %s1 = inlined_call_operand.hbm [shape: bf16[8,128], index: 1, kind: output, shape index: {}]
  %s2 = sld [smem:[#allocation0]]
  $region18: #{tpu_custom_call.1} parent=0
    _
  %s4 = ssub.s32 1, %s2
  %s5 = scalar_select 0, %s4, %s2
  $region1: #{tpu_custom_call.1} parent=0
    #allocation2 [shape = 'u8[4096]{0}', space=vmem, size = 0x1000, scoped, tag = 'input window, operand 0, single buffered']
    #allocation3 [shape = 's32[1]{0}', space=sflag, size = 0x4, scoped, tag = 'scoped memory for tpu_custom_call.1']
    #allocation4 [shape = 's32[1]{0}', space=sflag, size = 0x4, scoped, tag = 'scoped memory for tpu_custom_call.1']
    #allocation5 [shape = 'u8[2048]{0}', space=vmem, size = 0x800, scoped, tag = 'output window, operand 0, single buffered']
    %6 = vsyncpa [#allocation3], 0
    %7 = vsyncpa [#allocation4], 0
    // Predicated region
    $region2: #{tpu_custom_call.1} parent=1 // pred_check
      _
    $region3: #{tpu_custom_call.1} parent=1 // pred_check_branch
      %9 = sbr.rel (0) target = $region5
    $region4: #{tpu_custom_call.1} parent=1 // pred_region
      %s11 = ssub.s32 128, 128
      %12 = vsyncadd [#allocation3], %s11
      %s14 = sshll.u32 [#allocation2], 4
      %s15 = int_to_ptr.vmem [resolvable:$true] %s14
      %17 = dma.hbm_to_vmem [thread:$0]  %s0, 128, %s15, [#allocation3]
    $region5: #{tpu_custom_call.1} parent=1 // pred_fallthru
      _
    // Predicated region
    $region6: #{tpu_custom_call.1} parent=1 // pred_check
      _
    $region7: #{tpu_custom_call.1} parent=1 // pred_check_branch
      %19 = sbr.rel (0) target = $region9
    $region8: #{tpu_custom_call.1} parent=1 // pred_region
      %20 = dma.done [#allocation3], 128
    $region9: #{tpu_custom_call.1} parent=1 // pred_fallthru
      _
    %v21 = vld [vmem:[#allocation2] sm:$0xff]
    %v22 = vmul.f32 %v21, %v21
    %23 = vadd.xlane.f32.xlu0 %v22
    %v24 = vpop.xlane.xlu0 %23
    %v25 = vmax.f32 %v24, 1e-24
    %v26 = vrsqrt.pop %v25
    %v27 = vmul.f32 %v21, %v26
    %v28 = vpack.c.bf16 %v27, %v27
    %29 = vst [vmem:[#allocation5] sm:$0xf] %v28
    // Predicated region
    $region10: #{tpu_custom_call.1} parent=1 // pred_check
      _
    $region11: #{tpu_custom_call.1} parent=1 // pred_check_branch
      %31 = sbr.rel (0) target = $region13
    $region12: #{tpu_custom_call.1} parent=1 // pred_region
      %s33 = ssub.s32 64, 64
      %34 = vsyncadd [#allocation4], %s33
      %s36 = sshll.u32 [#allocation5], 4
      %s37 = int_to_ptr.vmem [resolvable:$true] %s36
      %39 = dma.vmem_to_hbm [thread:$0]  %s37, 64, %s1, [#allocation4]
    $region13: #{tpu_custom_call.1} parent=1 // pred_fallthru
      _
    // Predicated region
    $region14: #{tpu_custom_call.1} parent=1 // pred_check
      _
    $region15: #{tpu_custom_call.1} parent=1 // pred_check_branch
      %41 = sbr.rel (0) target = $region17
    $region16: #{tpu_custom_call.1} parent=1 // pred_region
      %42 = dma.done [#allocation4], 64
    $region17: #{tpu_custom_call.1} parent=1 // pred_fallthru
      _
    %43 = vsyncpa [#allocation3], 1
    %44 = vsyncpa [#allocation4], 1

</llo_original>
